<compile_context>
chip_gen: v5e
topology: v5e:2x2
jax: 0.10.0
libtpu: 0.0.40
codegen_flags: <defaults>
</compile_context>

<pallas_src>
import math

import jax
import jax.numpy as jnp
from jax.experimental import pallas as pl
from jax.experimental.pallas import tpu as pltpu

F_PAD = 128  # pad all feature axes to a full 128-lane vreg


# ----------------------------- in-kernel helpers ---------------------------- #

def _norm_adj(at, n):
    """From raw A^T build D^{-1/2}(A+I)^T (bf16) and D^{-1/2} (f32, [N,1])."""
    row_i = jax.lax.broadcasted_iota(jnp.int32, (n, n), 0)
    col_i = jax.lax.broadcasted_iota(jnp.int32, (n, n), 1)
    eye = (row_i == col_i).astype(jnp.float32)
    ahat_t = at + eye                                        # (A + I)^T
    deg = jnp.sum(ahat_t, axis=1, keepdims=True)             # [N,1] in-degree (f32)
    dinv = jnp.where(deg > 0.0, jax.lax.rsqrt(deg), 0.0)     # f32
    anorm_half = (dinv * ahat_t).astype(jnp.bfloat16)        # D^{-1/2} (A+I)^T
    return anorm_half, dinv


def _gcn(anorm_half, dinv, x, w, b):
    """out = D^{-1/2}(A+I)^T D^{-1/2} (x @ w) + b   (bf16 matmuls, f32 accumulate)."""
    xw = jnp.dot(x.astype(jnp.bfloat16), w.astype(jnp.bfloat16),
                 preferred_element_type=jnp.float32)
    xw = (dinv * xw).astype(jnp.bfloat16)                    # D^{-1/2} (X W)
    agg = jnp.dot(anorm_half, xw, preferred_element_type=jnp.float32)
    return agg + b


# ------------------------------- Pallas kernels ----------------------------- #

def _prepool_kernel(at_ref, x_ref, w1_ref, b1_ref, w2_ref, b2_ref, p_ref,
                    gated_ref, score_ref):
    """tanh(conv1) -> tanh(conv2) -> TopKPooling score + tanh gating, fully in VMEM."""
    n = at_ref.shape[0]
    anorm_half, dinv = _norm_adj(at_ref[...], n)             # shared by conv1 & conv2

    h = jnp.tanh(_gcn(anorm_half, dinv, x_ref[...], w1_ref[...], b1_ref[...]))
    h = jnp.tanh(_gcn(anorm_half, dinv, h, w2_ref[...], b2_ref[...]))

    # TopKPooling: score = tanh((h . p) / ||p||);  gated = h * score
    p = p_ref[...]                                           # [1, F_PAD]
    raw = jnp.sum(h * p, axis=1, keepdims=True)              # [N, 1]
    pn2 = jnp.sum(p * p, axis=1, keepdims=True)              # [1, 1]
    score = jnp.tanh(raw * jax.lax.rsqrt(pn2))               # [N, 1]

    gated_ref[...] = h * score
    score_ref[...] = jnp.broadcast_to(score, score_ref.shape)  # lane-dense slab


def _postpool_kernel(at_ref, x_ref, w3_ref, b3_ref, w4_ref, b4_ref, w5_ref, b5_ref,
                     o_ref):
    """tanh(conv3) -> tanh(conv4) -> conv5 on the pooled graph, fully in VMEM."""
    n = at_ref.shape[0]
    anorm_half, dinv = _norm_adj(at_ref[...], n)             # shared by conv3/4/5

    h = jnp.tanh(_gcn(anorm_half, dinv, x_ref[...], w3_ref[...], b3_ref[...]))
    h = jnp.tanh(_gcn(anorm_half, dinv, h, w4_ref[...], b4_ref[...]))
    o_ref[...] = _gcn(anorm_half, dinv, h, w5_ref[...], b5_ref[...])


# ------------------------------ pallas_call wrappers ------------------------ #

def _full(r, c):
    return pl.BlockSpec((r, c), lambda i: (0, 0))


def prepool_fused(a_t, x_pad, w1, b1, w2, b2, p):
    n = a_t.shape[0]
    fp = x_pad.shape[1]
    return pl.pallas_call(
        _prepool_kernel,
        out_shape=(jax.ShapeDtypeStruct((n, fp), jnp.float32),   # gated features
                   jax.ShapeDtypeStruct((n, fp), jnp.float32)),  # score (broadcast)
        grid=(1,),
        in_specs=[_full(n, n), _full(n, fp),
                  _full(fp, fp), _full(1, fp),
                  _full(fp, fp), _full(1, fp),
                  _full(1, fp)],
        out_specs=(_full(n, fp), _full(n, fp)),
        compiler_params=pltpu.CompilerParams(dimension_semantics=("arbitrary",)),
    )(a_t, x_pad, w1, b1, w2, b2, p)


def postpool_fused(a_t, x_pad, w3, b3, w4, b4, w5, b5):
    n = a_t.shape[0]
    fp = x_pad.shape[1]
    return pl.pallas_call(
        _postpool_kernel,
        out_shape=jax.ShapeDtypeStruct((n, fp), jnp.float32),
        grid=(1,),
        in_specs=[_full(n, n), _full(n, fp),
                  _full(fp, fp), _full(1, fp),
                  _full(fp, fp), _full(1, fp),
                  _full(fp, fp), _full(1, fp)],
        out_specs=_full(n, fp),
        compiler_params=pltpu.CompilerParams(dimension_semantics=("arbitrary",)),
    )(a_t, x_pad, w3, b3, w4, b4, w5, b5)


# -------------------------------- model forward ----------------------------- #

def topkpool_ae_forward(params, x, a, ratio):
    """Mirrors TOPKPOOL_AE.forward for a single graph (batch is all-zeros)."""
    n, f = x.shape
    fp = params["w1"].shape[0]
    x_pad = jnp.zeros((n, fp), jnp.float32).at[:, :f].set(x)
    a_t = a.T  # single transposed adjacency, reused by both pre-pool layers

    gated, score_slab = prepool_fused(a_t, x_pad,
                                      params["w1"], params["b1"],
                                      params["w2"], params["b2"],
                                      params["p"])
    score = score_slab[:, 0]

    # ---- TopKPooling(nhid, ratio): top-k node selection ----
    k = int(math.ceil(ratio * n))
    # TODO(synk): lax.top_k tie-breaking may differ from torch.topk on exact ties.
    _, perm = jax.lax.top_k(score, k)

    # TODO(synk): top-k gather / filter_adj / scatter-back are data-dependent index
    # plumbing kept in plain JAX; could be folded into the post-pool kernel via
    # PrefetchScalarGridSpec with perm as a scalar-prefetch argument.
    x_pooled = gated[perm]                                   # x[perm] * score[perm]
    a_compact = a[perm][:, perm]                             # filter_adj + relabel 0..k-1
    a_pool = jnp.zeros((n, n), jnp.float32).at[:k, :k].set(a_compact)

    # x_out = zeros_like(res); x_out[perm] = x  (pooled feats scattered to orig rows)
    x_out = jnp.zeros((n, fp), jnp.float32).at[perm].set(x_pooled)

    # NOTE: as in the original module, the relabelled pooled edges are applied to the
    # N-row x_out; GCNConv adds self-loops for all N nodes.
    out_pad = postpool_fused(a_pool.T, x_out,
                             params["w3"], params["b3"],
                             params["w4"], params["b4"],
                             params["w5"], params["b5"])
    return out_pad[:, :f], a_pool, 0, 0


# ------------------------------- parameter init ------------------------------ #

def _glorot(key, shape):
    fan_in, fan_out = shape
    limit = math.sqrt(6.0 / (fan_in + fan_out))
    return jax.random.uniform(key, shape, jnp.float32, -limit, limit)


def _pad2(w, rows, cols):
    return jnp.zeros((rows, cols), jnp.float32).at[: w.shape[0], : w.shape[1]].set(w)


def init_params(key, num_features, nhid, f_pad=F_PAD):
    ks = jax.random.split(key, 6)
    zrow = jnp.zeros((1, f_pad), jnp.float32)
    w1 = _glorot(ks[0], (num_features, nhid))
    w2 = _glorot(ks[1], (nhid, nhid))
    w3 = _glorot(ks[2], (nhid, nhid))
    w4 = _glorot(ks[3], (nhid, nhid))
    w5 = _glorot(ks[4], (nhid, num_features))
    lim = 1.0 / math.sqrt(nhid)
    p = jax.random.uniform(ks[5], (1, nhid), jnp.float32, -lim, lim)  # TopKPooling weight
    return {
        # GCNConv layers (weight glorot, bias zeros — matches PyG init), zero-padded
        "w1": _pad2(w1, f_pad, f_pad), "b1": zrow,
        "w2": _pad2(w2, f_pad, f_pad), "b2": zrow,
        "w3": _pad2(w3, f_pad, f_pad), "b3": zrow,
        "w4": _pad2(w4, f_pad, f_pad), "b4": zrow,
        "w5": _pad2(w5, f_pad, f_pad), "b5": zrow,
        "p": _pad2(p, 1, f_pad),
    }


# ------------------------------------ main ----------------------------------- #

if __name__ == "__main__":
    N = 16               # number of nodes (single graph, batch = zeros)
    NUM_FEATURES = 8     # args.num_features
    NHID = 32            # args.num_hidden
    RATIO = 0.5          # args.ratio

    key = jax.random.PRNGKey(0)
    kp, kx = jax.random.split(key)
    params = init_params(kp, NUM_FEATURES, NHID)

    # deterministic undirected graph: ring + distance-4 chords (edges in both directions)
    src, dst = [], []
    for i in range(N):
        for d in (1, 4):
            j = (i + d) % N
            src += [i, j]
            dst += [j, i]
    A = jnp.zeros((N, N), jnp.float32).at[jnp.array(src), jnp.array(dst)].set(1.0)

    x = jax.random.normal(kx, (N, NUM_FEATURES), jnp.float32)   # `nodes`
    batch = jnp.zeros((N,), jnp.int32)                          # single-graph batch vector

    out, a_pool, _, _ = topkpool_ae_forward(params, x, A, RATIO)
    out = jax.block_until_ready(out)

    assert out.shape == (N, NUM_FEATURES)
    assert out.dtype == jnp.float32
    assert bool(jnp.all(jnp.isfinite(out)))
    print("KERNEL_OK")
</pallas_src>

<mosaic_0001>
module attributes {stable_mosaic.version = 11 : i64} {
  func.func @_prepool_kernel(%arg0: i32, %arg1: memref<16x16xf32, #tpu.memory_space<vmem>>, %arg2: memref<16x128xf32, #tpu.memory_space<vmem>>, %arg3: memref<128x128xf32, #tpu.memory_space<vmem>>, %arg4: memref<1x128xf32, #tpu.memory_space<vmem>>, %arg5: memref<128x128xf32, #tpu.memory_space<vmem>>, %arg6: memref<1x128xf32, #tpu.memory_space<vmem>>, %arg7: memref<1x128xf32, #tpu.memory_space<vmem>>, %arg8: memref<16x128xf32, #tpu.memory_space<vmem>>, %arg9: memref<16x128xf32, #tpu.memory_space<vmem>>) attributes {dimension_semantics = [#tpu.dimension_semantics<arbitrary>], iteration_bounds = array<i64: 1>, scalar_prefetch = 0 : i64, scratch_operands = 0 : i64, tpu.core_type = #tpu.core_type<tc>, window_params = [{pipeline_mode = #tpu.pipeline_mode<synchronous>, transform_indices = @transform_0, window_bounds = array<i64: 16, 16>}, {pipeline_mode = #tpu.pipeline_mode<synchronous>, transform_indices = @transform_1, window_bounds = array<i64: 16, 128>}, {pipeline_mode = #tpu.pipeline_mode<synchronous>, transform_indices = @transform_2, window_bounds = array<i64: 128, 128>}, {pipeline_mode = #tpu.pipeline_mode<synchronous>, transform_indices = @transform_3, window_bounds = array<i64: 1, 128>}, {pipeline_mode = #tpu.pipeline_mode<synchronous>, transform_indices = @transform_4, window_bounds = array<i64: 128, 128>}, {pipeline_mode = #tpu.pipeline_mode<synchronous>, transform_indices = @transform_5, window_bounds = array<i64: 1, 128>}, {pipeline_mode = #tpu.pipeline_mode<synchronous>, transform_indices = @transform_6, window_bounds = array<i64: 1, 128>}, {pipeline_mode = #tpu.pipeline_mode<synchronous>, transform_indices = @transform_7, window_bounds = array<i64: 16, 128>}, {pipeline_mode = #tpu.pipeline_mode<synchronous>, transform_indices = @transform_8, window_bounds = array<i64: 16, 128>}]} {
    %c0 = arith.constant 0 : index
    %c0_0 = arith.constant 0 : index
    %0 = vector.load %arg1[%c0, %c0_0] : memref<16x16xf32, #tpu.memory_space<vmem>>, vector<16x16xf32>
    %1 = tpu.iota {dimensions = array<i32: 0>} : vector<16x16xi32>
    %2 = tpu.iota {dimensions = array<i32: 1>} : vector<16x16xi32>
    %3 = arith.cmpi eq, %1, %2 : vector<16x16xi32>
    %4 = arith.extui %3 : vector<16x16xi1> to vector<16x16xi32>
    %5 = arith.sitofp %4 : vector<16x16xi32> to vector<16x16xf32>
    %6 = arith.addf %0, %5 : vector<16x16xf32>
    %cst = arith.constant dense<0.000000e+00> : vector<16xf32>
    %7 = vector.multi_reduction <add>, %6, %cst [1] : vector<16x16xf32> to vector<16xf32>
    %8 = vector.shape_cast %7 : vector<16xf32> to vector<16x1xf32>
    %cst_1 = arith.constant 0.000000e+00 : f32
    %9 = vector.broadcast %cst_1 : f32 to vector<16x1xf32>
    %10 = arith.cmpf ogt, %8, %9 : vector<16x1xf32>
    %11 = math.rsqrt %8 : vector<16x1xf32>
    %cst_2 = arith.constant 0.000000e+00 : f32
    %12 = vector.broadcast %cst_2 : f32 to vector<16x1xf32>
    %13 = arith.select %10, %11, %12 : vector<16x1xi1>, vector<16x1xf32>
    %14 = vector.broadcast %13 : vector<16x1xf32> to vector<16x16xf32>
    %15 = arith.mulf %14, %6 : vector<16x16xf32>
    %16 = arith.truncf %15 : vector<16x16xf32> to vector<16x16xbf16>
    %c0_3 = arith.constant 0 : index
    %c0_4 = arith.constant 0 : index
    %17 = vector.load %arg2[%c0_3, %c0_4] : memref<16x128xf32, #tpu.memory_space<vmem>>, vector<16x128xf32>
    %c0_5 = arith.constant 0 : index
    %c0_6 = arith.constant 0 : index
    %18 = vector.load %arg3[%c0_5, %c0_6] : memref<128x128xf32, #tpu.memory_space<vmem>>, vector<128x128xf32>
    %c0_7 = arith.constant 0 : index
    %c0_8 = arith.constant 0 : index
    %19 = vector.load %arg4[%c0_7, %c0_8] : memref<1x128xf32, #tpu.memory_space<vmem>>, vector<1x128xf32>
    %20 = arith.truncf %17 : vector<16x128xf32> to vector<16x128xbf16>
    %21 = arith.truncf %18 : vector<128x128xf32> to vector<128x128xbf16>
    %cst_9 = arith.constant dense<0.000000e+00> : vector<16x128xf32>
    %22 = tpu.matmul %20, %21, %cst_9 {dimension_numbers = #tpu.dot_dimension_numbers<[1], [0], [0], [1], [0, 0, 1, 1], [], []>} : vector<16x128xbf16>, vector<128x128xbf16>, vector<16x128xf32> -> vector<16x128xf32>
    %23 = vector.broadcast %13 : vector<16x1xf32> to vector<16x128xf32>
    %24 = arith.mulf %23, %22 : vector<16x128xf32>
    %25 = arith.truncf %24 : vector<16x128xf32> to vector<16x128xbf16>
    %cst_10 = arith.constant dense<0.000000e+00> : vector<16x128xf32>
    %26 = tpu.matmul %16, %25, %cst_10 {dimension_numbers = #tpu.dot_dimension_numbers<[1], [0], [0], [1], [0, 0, 1, 1], [], []>} : vector<16x16xbf16>, vector<16x128xbf16>, vector<16x128xf32> -> vector<16x128xf32>
    %27 = vector.broadcast %19 : vector<1x128xf32> to vector<16x128xf32>
    %28 = arith.addf %26, %27 : vector<16x128xf32>
    %29 = math.tanh %28 : vector<16x128xf32>
    %c0_11 = arith.constant 0 : index
    %c0_12 = arith.constant 0 : index
    %30 = vector.load %arg5[%c0_11, %c0_12] : memref<128x128xf32, #tpu.memory_space<vmem>>, vector<128x128xf32>
    %c0_13 = arith.constant 0 : index
    %c0_14 = arith.constant 0 : index
    %31 = vector.load %arg6[%c0_13, %c0_14] : memref<1x128xf32, #tpu.memory_space<vmem>>, vector<1x128xf32>
    %32 = arith.truncf %29 : vector<16x128xf32> to vector<16x128xbf16>
    %33 = arith.truncf %30 : vector<128x128xf32> to vector<128x128xbf16>
    %cst_15 = arith.constant dense<0.000000e+00> : vector<16x128xf32>
    %34 = tpu.matmul %32, %33, %cst_15 {dimension_numbers = #tpu.dot_dimension_numbers<[1], [0], [0], [1], [0, 0, 1, 1], [], []>} : vector<16x128xbf16>, vector<128x128xbf16>, vector<16x128xf32> -> vector<16x128xf32>
    %35 = vector.broadcast %13 : vector<16x1xf32> to vector<16x128xf32>
    %36 = arith.mulf %35, %34 : vector<16x128xf32>
    %37 = arith.truncf %36 : vector<16x128xf32> to vector<16x128xbf16>
    %cst_16 = arith.constant dense<0.000000e+00> : vector<16x128xf32>
    %38 = tpu.matmul %16, %37, %cst_16 {dimension_numbers = #tpu.dot_dimension_numbers<[1], [0], [0], [1], [0, 0, 1, 1], [], []>} : vector<16x16xbf16>, vector<16x128xbf16>, vector<16x128xf32> -> vector<16x128xf32>
    %39 = vector.broadcast %31 : vector<1x128xf32> to vector<16x128xf32>
    %40 = arith.addf %38, %39 : vector<16x128xf32>
    %41 = math.tanh %40 : vector<16x128xf32>
    %c0_17 = arith.constant 0 : index
    %c0_18 = arith.constant 0 : index
    %42 = vector.load %arg7[%c0_17, %c0_18] : memref<1x128xf32, #tpu.memory_space<vmem>>, vector<1x128xf32>
    %43 = vector.broadcast %42 : vector<1x128xf32> to vector<16x128xf32>
    %44 = arith.mulf %41, %43 : vector<16x128xf32>
    %cst_19 = arith.constant dense<0.000000e+00> : vector<16xf32>
    %45 = vector.multi_reduction <add>, %44, %cst_19 [1] : vector<16x128xf32> to vector<16xf32>
    %46 = vector.shape_cast %45 : vector<16xf32> to vector<16x1xf32>
    %47 = arith.mulf %42, %42 : vector<1x128xf32>
    %cst_20 = arith.constant dense<0.000000e+00> : vector<1xf32>
    %48 = vector.multi_reduction <add>, %47, %cst_20 [1] : vector<1x128xf32> to vector<1xf32>
    %49 = vector.shape_cast %48 : vector<1xf32> to vector<1x1xf32>
    %50 = math.rsqrt %49 : vector<1x1xf32>
    %51 = vector.broadcast %50 : vector<1x1xf32> to vector<16x1xf32>
    %52 = arith.mulf %46, %51 : vector<16x1xf32>
    %53 = math.tanh %52 : vector<16x1xf32>
    %54 = vector.broadcast %53 : vector<16x1xf32> to vector<16x128xf32>
    %55 = arith.mulf %41, %54 : vector<16x128xf32>
    %c0_21 = arith.constant 0 : index
    %c0_22 = arith.constant 0 : index
    %56 = vector.load %arg8[%c0_21, %c0_22] : memref<16x128xf32, #tpu.memory_space<vmem>>, vector<16x128xf32>
    tpu.vector_store %arg8[%c0_21, %c0_22], %55 {strides = array<i32>} : memref<16x128xf32, #tpu.memory_space<vmem>>, vector<16x128xf32>,
    %57 = vector.shape_cast %53 : vector<16x1xf32> to vector<16x1xf32>
    %58 = vector.broadcast %57 : vector<16x1xf32> to vector<16x128xf32>
    %c0_23 = arith.constant 0 : index
    %c0_24 = arith.constant 0 : index
    %59 = vector.load %arg9[%c0_23, %c0_24] : memref<16x128xf32, #tpu.memory_space<vmem>>, vector<16x128xf32>
    tpu.vector_store %arg9[%c0_23, %c0_24], %58 {strides = array<i32>} : memref<16x128xf32, #tpu.memory_space<vmem>>, vector<16x128xf32>,
    return
  }
  func.func @transform_0(%arg0: i32) -> (i32, i32) {
    %c0_i32 = arith.constant 0 : i32
    %c0_i32_0 = arith.constant 0 : i32
    %c0_i32_1 = arith.constant 0 : i32
    return %c0_i32, %c0_i32_0 : i32, i32
  }
  func.func @transform_1(%arg0: i32) -> (i32, i32) {
    %c0_i32 = arith.constant 0 : i32
    %c0_i32_0 = arith.constant 0 : i32
    %c0_i32_1 = arith.constant 0 : i32
    return %c0_i32, %c0_i32_0 : i32, i32
  }
  func.func @transform_2(%arg0: i32) -> (i32, i32) {
    %c0_i32 = arith.constant 0 : i32
    %c0_i32_0 = arith.constant 0 : i32
    %c0_i32_1 = arith.constant 0 : i32
    return %c0_i32, %c0_i32_0 : i32, i32
  }
  func.func @transform_3(%arg0: i32) -> (i32, i32) {
    %c0_i32 = arith.constant 0 : i32
    %c0_i32_0 = arith.constant 0 : i32
    %c0_i32_1 = arith.constant 0 : i32
    return %c0_i32, %c0_i32_0 : i32, i32
  }
  func.func @transform_4(%arg0: i32) -> (i32, i32) {
    %c0_i32 = arith.constant 0 : i32
    %c0_i32_0 = arith.constant 0 : i32
    %c0_i32_1 = arith.constant 0 : i32
    return %c0_i32, %c0_i32_0 : i32, i32
  }
  func.func @transform_5(%arg0: i32) -> (i32, i32) {
    %c0_i32 = arith.constant 0 : i32
    %c0_i32_0 = arith.constant 0 : i32
    %c0_i32_1 = arith.constant 0 : i32
    return %c0_i32, %c0_i32_0 : i32, i32
  }
  func.func @transform_6(%arg0: i32) -> (i32, i32) {
    %c0_i32 = arith.constant 0 : i32
    %c0_i32_0 = arith.constant 0 : i32
    %c0_i32_1 = arith.constant 0 : i32
    return %c0_i32, %c0_i32_0 : i32, i32
  }
  func.func @transform_7(%arg0: i32) -> (i32, i32) {
    %c0_i32 = arith.constant 0 : i32
    %c0_i32_0 = arith.constant 0 : i32
    %c0_i32_1 = arith.constant 0 : i32
    return %c0_i32, %c0_i32_0 : i32, i32
  }
  func.func @transform_8(%arg0: i32) -> (i32, i32) {
    %c0_i32 = arith.constant 0 : i32
    %c0_i32_0 = arith.constant 0 : i32
    %c0_i32_1 = arith.constant 0 : i32
    return %c0_i32, %c0_i32_0 : i32, i32
  }
}

</mosaic_0001>

<llo_original>
// kernel: tpu_custom_call.1
$region0: #{tpu_custom_call.1}
  #allocation0 [shape = 'u32[]', space=smem, size = 0x4, offset = 0x4, fixed_abs, tag = 'smem constant byte address 0x4 - core index']
  #allocation1 [shape = 'u32[72,128]{1,0:T(1,128)}', space=vmem, size = 0x9000, scoped, tag = 'internal scratch']
  %s0 = inlined_call_operand.hbm [shape: f32[16,16], index: 0, kind: input, shape index: {}]
  %s1 = inlined_call_operand.hbm [shape: f32[16,128], index: 1, kind: input, shape index: {}]
  %s2 = inlined_call_operand.hbm [shape: f32[128,128], index: 2, kind: input, shape index: {}]
  %s3 = inlined_call_operand.vmem [shape: f32[1,128], index: 3, kind: input, shape index: {}]
  %s4 = inlined_call_operand.hbm [shape: f32[128,128], index: 4, kind: input, shape index: {}]
  %s5 = inlined_call_operand.vmem [shape: f32[1,128], index: 5, kind: input, shape index: {}]
  %s6 = inlined_call_operand.vmem [shape: f32[1,128], index: 6, kind: input, shape index: {}]
  %s7 = inlined_call_operand.hbm [shape: f32[16,128], index: 7, kind: output, shape index: {0}]
  %s8 = inlined_call_operand.hbm [shape: f32[16,128], index: 8, kind: output, shape index: {1}]
  %9 = xla_tuple %s7, %s8
  %s10 = sld [smem:[#allocation0]]
  $region62: #{tpu_custom_call.1} parent=0
    _
  %s12 = ssub.s32 1, %s10
  %s13 = scalar_select 0, %s12, %s10
  $region1: #{tpu_custom_call.1} parent=0
    #allocation2 [shape = 'u8[8192]{0}', space=vmem, size = 0x2000, scoped, tag = 'input window, operand 0, single buffered']
    #allocation3 [shape = 's32[1]{0}', space=sflag, size = 0x4, scoped, tag = 'scoped memory for tpu_custom_call.1']
    #allocation4 [shape = 's32[1]{0}', space=sflag, size = 0x4, scoped, tag = 'scoped memory for tpu_custom_call.1']
    #allocation5 [shape = 'u8[8192]{0}', space=vmem, size = 0x2000, scoped, tag = 'input window, operand 1, single buffered']
    #allocation6 [shape = 's32[1]{0}', space=sflag, size = 0x4, scoped, tag = 'scoped memory for tpu_custom_call.1']
    #allocation7 [shape = 'u8[65536]{0}', space=vmem, size = 0x10000, scoped, tag = 'input window, operand 2, single buffered']
    #allocation8 [shape = 'u8[65536]{0}', space=vmem, size = 0x10000, scoped, tag = 'input window, operand 4, single buffered']
    #allocation9 [shape = 's32[1]{0}', space=sflag, size = 0x4, scoped, tag = 'scoped memory for tpu_custom_call.1']
    #allocation10 [shape = 'u8[8192]{0}', space=vmem, size = 0x2000, scoped, tag = 'output window, operand 0, single buffered']
    #allocation11 [shape = 'u8[8192]{0}', space=vmem, size = 0x2000, scoped, tag = 'output window, operand 1, single buffered']
    #allocation12 [shape = 's32[1]{0}', space=sflag, size = 0x4, scoped, tag = 'scoped memory for tpu_custom_call.1']
    %14 = vsyncpa [#allocation3], 0
    %15 = vsyncpa [#allocation6], 0
    %16 = vsyncpa [#allocation9], 0
    %17 = vsyncpa [#allocation4], 0
    %18 = vsyncpa [#allocation12], 0
    // Predicated region
    $region2: #{tpu_custom_call.1} parent=1 // pred_check
      _
    $region3: #{tpu_custom_call.1} parent=1 // pred_check_branch
      %20 = sbr.rel (0) target = $region5
    $region4: #{tpu_custom_call.1} parent=1 // pred_region
      %22 = vsyncadd [#allocation3], 0
      %s23 = sshll.u32 %s0, 4
      %s24 = int_to_ptr.hbm [resolvable:$true] %s23
      %s25 = sshll.u32 [#allocation2], 4
      %s26 = int_to_ptr.vmem [resolvable:$true] %s25
      %31 = dma.hbm_to_vmem [thread:$0]  %s24, 256, %s26, [#allocation3], 128, 128, 8
    $region5: #{tpu_custom_call.1} parent=1 // pred_fallthru
      _
    // Predicated region
    $region6: #{tpu_custom_call.1} parent=1 // pred_check
      _
    $region7: #{tpu_custom_call.1} parent=1 // pred_check_branch
      %33 = sbr.rel (0) target = $region9
    $region8: #{tpu_custom_call.1} parent=1 // pred_region
      %35 = vsyncadd [#allocation6], 0
      %s36 = sshll.u32 %s1, 4
      %s37 = int_to_ptr.hbm [resolvable:$true] %s36
      %s38 = sshll.u32 [#allocation5], 4
      %s39 = int_to_ptr.vmem [resolvable:$true] %s38
      %44 = dma.hbm_to_vmem [thread:$0]  %s37, 256, %s39, [#allocation6], 128, 128, 8
    $region9: #{tpu_custom_call.1} parent=1 // pred_fallthru
      _
    // Predicated region
    $region10: #{tpu_custom_call.1} parent=1 // pred_check
      _
    $region11: #{tpu_custom_call.1} parent=1 // pred_check_branch
      %46 = sbr.rel (0) target = $region13
    $region12: #{tpu_custom_call.1} parent=1 // pred_region
      %48 = vsyncadd [#allocation6], 0
      %s49 = sshll.u32 %s2, 4
      %s50 = int_to_ptr.hbm [resolvable:$true] %s49
      %s51 = sshll.u32 [#allocation7], 4
      %s52 = int_to_ptr.vmem [resolvable:$true] %s51
      %57 = dma.hbm_to_vmem [thread:$0]  %s50, 2048, %s52, [#allocation6], 128, 128, 8
    $region13: #{tpu_custom_call.1} parent=1 // pred_fallthru
      _
    // Predicated region
    $region14: #{tpu_custom_call.1} parent=1 // pred_check
      _
    $region15: #{tpu_custom_call.1} parent=1 // pred_check_branch
      %59 = sbr.rel (0) target = $region17
    $region16: #{tpu_custom_call.1} parent=1 // pred_region
      _
    $region17: #{tpu_custom_call.1} parent=1 // pred_fallthru
      _
    // Predicated region
    $region18: #{tpu_custom_call.1} parent=1 // pred_check
      _
    $region19: #{tpu_custom_call.1} parent=1 // pred_check_branch
      %61 = sbr.rel (0) target = $region21
    $region20: #{tpu_custom_call.1} parent=1 // pred_region
      %63 = vsyncadd [#allocation9], 0
      %s64 = sshll.u32 %s4, 4
      %s65 = int_to_ptr.hbm [resolvable:$true] %s64
      %s66 = sshll.u32 [#allocation8], 4
      %s67 = int_to_ptr.vmem [resolvable:$true] %s66
      %72 = dma.hbm_to_vmem [thread:$0]  %s65, 2048, %s67, [#allocation9], 128, 128, 8
    $region21: #{tpu_custom_call.1} parent=1 // pred_fallthru
      _
    // Predicated region
    $region22: #{tpu_custom_call.1} parent=1 // pred_check
      _
    $region23: #{tpu_custom_call.1} parent=1 // pred_check_branch
      %74 = sbr.rel (0) target = $region25
    $region24: #{tpu_custom_call.1} parent=1 // pred_region
      _
    $region25: #{tpu_custom_call.1} parent=1 // pred_fallthru
      _
    // Predicated region
    $region26: #{tpu_custom_call.1} parent=1 // pred_check
      _
    $region27: #{tpu_custom_call.1} parent=1 // pred_check_branch
      %76 = sbr.rel (0) target = $region29
    $region28: #{tpu_custom_call.1} parent=1 // pred_region
      _
    $region29: #{tpu_custom_call.1} parent=1 // pred_fallthru
      _
    // Predicated region
    $region30: #{tpu_custom_call.1} parent=1 // pred_check
      _
    $region31: #{tpu_custom_call.1} parent=1 // pred_check_branch
      %78 = sbr.rel (0) target = $region33
    $region32: #{tpu_custom_call.1} parent=1 // pred_region
      %80 = dma.done [#allocation3], 256
    $region33: #{tpu_custom_call.1} parent=1 // pred_fallthru
      _
    // Predicated region
    $region34: #{tpu_custom_call.1} parent=1 // pred_check
      _
    $region35: #{tpu_custom_call.1} parent=1 // pred_check_branch
      %82 = sbr.rel (0) target = $region37
    $region36: #{tpu_custom_call.1} parent=1 // pred_region
      %84 = dma.done [#allocation6], 256
    $region37: #{tpu_custom_call.1} parent=1 // pred_fallthru
      _
    // Predicated region
    $region38: #{tpu_custom_call.1} parent=1 // pred_check
      _
    $region39: #{tpu_custom_call.1} parent=1 // pred_check_branch
      %86 = sbr.rel (0) target = $region41
    $region40: #{tpu_custom_call.1} parent=1 // pred_region
      %88 = dma.done [#allocation6], 2048
    $region41: #{tpu_custom_call.1} parent=1 // pred_fallthru
      _
    // Predicated region
    $region42: #{tpu_custom_call.1} parent=1 // pred_check
      _
    $region43: #{tpu_custom_call.1} parent=1 // pred_check_branch
      %90 = sbr.rel (0) target = $region45
    $region44: #{tpu_custom_call.1} parent=1 // pred_region
      %92 = dma.done [#allocation9], 2048
    $region45: #{tpu_custom_call.1} parent=1 // pred_fallthru
      _
    %v94 = vld [vmem:[#allocation2] sm:$0xff]
    %v95 = vld [vmem:[#allocation2 + $0x8] sm:$0xff]
    %v96 = vlaneseq
    %v97 = vshrl.u32 %v96, 7
    %v98 = vadd.s32 %v97, 8
    %v99 = vlaneseq
    %v100 = vand.u32 %v99, 127
    %vm101 = vcmp.eq.s32.totalorder %v97, %v100
    %vm102 = vcmp.eq.s32.totalorder %v98, %v100
    %v103 = vsel %vm101, 1, 0
    %v104 = vsel %vm102, 1, 0
    %v105 = vcvt.s32.f32 %v103
    %v106 = vcvt.s32.f32 %v104
    %v107 = vadd.f32 %v94, %v105
    %v108 = vadd.f32 %v95, %v106
    %vm109 = vcmask 130048
    %v110 = vsel %vm109, %v107, 0.0
    %111 = vadd.xlane.f32.xlu0 %v110
    %v112 = vpop.xlane.xlu0 %111
    %v113 = vsel %vm109, %v108, 0.0
    %114 = vadd.xlane.f32.xlu0 %v113
    %v115 = vpop.xlane.xlu0 %114
    %vm116 = vcmp.gt.f32.partialorder %v112, 0.0
    %vm117 = vcmp.gt.f32.partialorder %v115, 0.0
    %v118 = vrsqrt.pop %v112
    %v119 = vmul.f32 %v118, %v112
    %v120 = vmul.f32 %v119, %v118
    %v121 = vmul.f32 0.5, %v120
    %v122 = vsub.f32 1.5, %v121
    %v123 = vmul.f32 %v118, %v122
    %vm124 = vweird.f32 %v112
    %vm125 = vweird.f32 %v118
    %vm126 = vmor %vm124, %vm125
    %v127 = vsel %vm126, %v118, %v123
    %v128 = vrsqrt.pop %v115
    %v129 = vmul.f32 %v128, %v115
    %v130 = vmul.f32 %v129, %v128
    %v131 = vmul.f32 0.5, %v130
    %v132 = vsub.f32 1.5, %v131
    %v133 = vmul.f32 %v128, %v132
    %vm134 = vweird.f32 %v115
    %vm135 = vweird.f32 %v128
    %vm136 = vmor %vm134, %vm135
    %v137 = vsel %vm136, %v128, %v133
    %v138 = vsel %vm116, %v127, 0.0
    %v139 = vsel %vm117, %v137, 0.0
    %v140 = vmul.f32 %v138, %v107
    %v141 = vmul.f32 %v139, %v108
    %v142 = vpack.c.bf16 %v141, %v140
    %v143 = vld [vmem:[#allocation5] sm:$0xff]
    %v144 = vld [vmem:[#allocation5 + $0x8] sm:$0xff]
    %v145 = vld [vmem:[#allocation7] sm:$0xff]
    %v146 = vld [vmem:[#allocation7 + $0x8] sm:$0xff]
    %v147 = vld [vmem:[#allocation7 + $0x10] sm:$0xff]
    %v148 = vld [vmem:[#allocation7 + $0x18] sm:$0xff]
    %v149 = vld [vmem:[#allocation7 + $0x20] sm:$0xff]
    %v150 = vld [vmem:[#allocation7 + $0x28] sm:$0xff]
    %v151 = vld [vmem:[#allocation7 + $0x30] sm:$0xff]
    %v152 = vld [vmem:[#allocation7 + $0x38] sm:$0xff]
    %v153 = vld [vmem:[#allocation7 + $0x40] sm:$0xff]
    %v154 = vld [vmem:[#allocation7 + $0x48] sm:$0xff]
    %v155 = vld [vmem:[#allocation7 + $0x50] sm:$0xff]
    %v156 = vld [vmem:[#allocation7 + $0x58] sm:$0xff]
    %v157 = vld [vmem:[#allocation7 + $0x60] sm:$0xff]
    %v158 = vld [vmem:[#allocation7 + $0x68] sm:$0xff]
    %v159 = vld [vmem:[#allocation7 + $0x70] sm:$0xff]
    %v160 = vld [vmem:[#allocation7 + $0x78] sm:$0xff]
    %v161 = vld [vmem:[%s3] sm:$0x1]
    %v162 = vpack.c.bf16 %v144, %v143
    %v163 = vpack.c.bf16 %v146, %v145
    %v164 = vpack.c.bf16 %v148, %v147
    %v165 = vpack.c.bf16 %v150, %v149
    %v166 = vpack.c.bf16 %v152, %v151
    %v167 = vpack.c.bf16 %v154, %v153
    %v168 = vpack.c.bf16 %v156, %v155
    %v169 = vpack.c.bf16 %v158, %v157
    %v170 = vpack.c.bf16 %v160, %v159
    %171 = vmatpush.bf16.msra.mxu0 %v170
    %172 = vmatpush.bf16.msra.mxu0 %v169
    %173 = vmatpush.bf16.msra.mxu0 %v168
    %174 = vmatpush.bf16.msra.mxu0 %v167
    %175 = vmatpush.bf16.msra.mxu0 %v166
    %176 = vmatpush.bf16.msra.mxu0 %v165
    %177 = vmatpush.bf16.msra.mxu0 %v164
    %178 = vmatpush.bf16.msra.mxu0 %v163
    %179 = vmatmul.bf16.gmra.mxu0 %v162
    %v180 = vpop.f32.mrf.mxu0
    %v181 = vadd.f32 0.0, %v180
    %v182 = vpop.f32.mrf.mxu0
    %v183 = vadd.f32 0.0, %v182
    %184 = vdwg.mxu0
    %v185 = vmul.f32 %v138, %v181
    %v186 = vmul.f32 %v139, %v183
    %v187 = vpack.c.bf16 %v186, %v185
    %v189 = vperm.slane %v161, 0
    %v192 = vsel %vm109, %v142, 0
    %194 = vmatpush.bf16.msra.mxu0 0
    %195 = vmatpush.bf16.msra.mxu0 0
    %196 = vmatpush.bf16.msra.mxu0 0
    %197 = vmatpush.bf16.msra.mxu0 0
    %198 = vmatpush.bf16.msra.mxu0 0
    %199 = vmatpush.bf16.msra.mxu0 0
    %200 = vmatpush.bf16.msra.mxu0 0
    %201 = vmatpush.bf16.msra.mxu0 %v187
    %202 = vmatmul.bf16.gmra.mxu0 %v192
    %v203 = vpop.f32.mrf.mxu0
    %v204 = vadd.f32 %v189, %v203
    %v205 = vpop.f32.mrf.mxu0
    %v206 = vadd.f32 %v189, %v205
    %207 = vdwg.mxu0
    %v208 = vtanh.pop %v204
    %v209 = vtanh.pop %v206
    %v210 = vld [vmem:[#allocation8] sm:$0xff]
    %v211 = vld [vmem:[#allocation8 + $0x8] sm:$0xff]
    %v212 = vld [vmem:[#allocation8 + $0x10] sm:$0xff]
    %v213 = vld [vmem:[#allocation8 + $0x18] sm:$0xff]
    %v214 = vld [vmem:[#allocation8 + $0x20] sm:$0xff]
    %v215 = vld [vmem:[#allocation8 + $0x28] sm:$0xff]
    %v216 = vld [vmem:[#allocation8 + $0x30] sm:$0xff]
    %v217 = vld [vmem:[#allocation8 + $0x38] sm:$0xff]
    %v218 = vld [vmem:[#allocation8 + $0x40] sm:$0xff]
    %v219 = vld [vmem:[#allocation8 + $0x48] sm:$0xff]
    %v220 = vld [vmem:[#allocation8 + $0x50] sm:$0xff]
    %v221 = vld [vmem:[#allocation8 + $0x58] sm:$0xff]
    %v222 = vld [vmem:[#allocation8 + $0x60] sm:$0xff]
    %v223 = vld [vmem:[#allocation8 + $0x68] sm:$0xff]
    %v224 = vld [vmem:[#allocation8 + $0x70] sm:$0xff]
    %v225 = vld [vmem:[#allocation8 + $0x78] sm:$0xff]
    %v226 = vld [vmem:[%s5] sm:$0x1]
    %v227 = vpack.c.bf16 %v209, %v208
    %v228 = vpack.c.bf16 %v211, %v210
    %v229 = vpack.c.bf16 %v213, %v212
    %v230 = vpack.c.bf16 %v215, %v214
    %v231 = vpack.c.bf16 %v217, %v216
    %v232 = vpack.c.bf16 %v219, %v218
    %v233 = vpack.c.bf16 %v221, %v220
    %v234 = vpack.c.bf16 %v223, %v222
    %v235 = vpack.c.bf16 %v225, %v224
    %236 = vmatpush.bf16.msra.mxu0 %v235
    %237 = vmatpush.bf16.msra.mxu0 %v234
    %238 = vmatpush.bf16.msra.mxu0 %v233
    %239 = vmatpush.bf16.msra.mxu0 %v232
    %240 = vmatpush.bf16.msra.mxu0 %v231
    %241 = vmatpush.bf16.msra.mxu0 %v230
    %242 = vmatpush.bf16.msra.mxu0 %v229
    %243 = vmatpush.bf16.msra.mxu0 %v228
    %244 = vmatmul.bf16.gmra.mxu0 %v227
    %v245 = vpop.f32.mrf.mxu0
    %v246 = vadd.f32 0.0, %v245
    %v247 = vpop.f32.mrf.mxu0
    %v248 = vadd.f32 0.0, %v247
    %249 = vdwg.mxu0
    %v250 = vmul.f32 %v138, %v246
    %v251 = vmul.f32 %v139, %v248
    %v252 = vpack.c.bf16 %v251, %v250
    %v254 = vperm.slane %v226, 0
    %256 = vmatpush.bf16.msra.mxu0 0
    %257 = vmatpush.bf16.msra.mxu0 0
    %258 = vmatpush.bf16.msra.mxu0 0
    %259 = vmatpush.bf16.msra.mxu0 0
    %260 = vmatpush.bf16.msra.mxu0 0
    %261 = vmatpush.bf16.msra.mxu0 0
    %262 = vmatpush.bf16.msra.mxu0 0
    %263 = vmatpush.bf16.msra.mxu0 %v252
    %264 = vmatmul.bf16.gmra.mxu0 %v192
    %v265 = vpop.f32.mrf.mxu0
    %v266 = vadd.f32 %v254, %v265
    %v267 = vpop.f32.mrf.mxu0
    %v268 = vadd.f32 %v254, %v267
    %269 = vdwg.mxu0
    %v270 = vtanh.pop %v266
    %v271 = vtanh.pop %v268
    %v272 = vld [vmem:[%s6] sm:$0x1]
    %v274 = vperm.slane %v272, 0
    %v276 = vmul.f32 %v270, %v274
    %v277 = vmul.f32 %v271, %v274
    %278 = vadd.xlane.f32.xlu0 %v276
    %v279 = vpop.xlane.xlu0 %278
    %280 = vadd.xlane.f32.xlu0 %v277
    %v281 = vpop.xlane.xlu0 %280
    %v282 = vmul.f32 %v272, %v272
    %vm283 = vcmask 1040384
    %v284 = vsel %vm283, %v282, 0.0
    %285 = vadd.xlane.f32.xlu0 %v284
    %v286 = vpop.xlane.xlu0 %285
    %v287 = vrsqrt.pop %v286
    %v288 = vmul.f32 %v287, %v286
    %v289 = vmul.f32 %v288, %v287
    %v290 = vmul.f32 0.5, %v289
    %v291 = vsub.f32 1.5, %v290
    %v292 = vmul.f32 %v287, %v291
    %vm293 = vweird.f32 %v286
    %vm294 = vweird.f32 %v287
    %vm295 = vmor %vm293, %vm294
    %v296 = vsel %vm295, %v287, %v292
    %v297 = vperm.slane %v296, 0
    %v298 = vmul.f32 %v279, %v297
    %v299 = vmul.f32 %v281, %v297
    %v300 = vtanh.pop %v298
    %v301 = vtanh.pop %v299
    %v302 = vmul.f32 %v270, %v300
    %v303 = vmul.f32 %v271, %v301
    %304 = vst [vmem:[#allocation10] sm:$0xff] %v302
    %305 = vst [vmem:[#allocation10 + $0x8] sm:$0xff] %v303
    %306 = vst [vmem:[#allocation11] sm:$0xff] %v300
    %307 = vst [vmem:[#allocation11 + $0x8] sm:$0xff] %v301
    // Predicated region
    $region46: #{tpu_custom_call.1} parent=1 // pred_check
      _
    $region47: #{tpu_custom_call.1} parent=1 // pred_check_branch
      %309 = sbr.rel (0) target = $region49
    $region48: #{tpu_custom_call.1} parent=1 // pred_region
      %311 = vsyncadd [#allocation4], 0
      %s312 = sshll.u32 [#allocation10], 4
      %s313 = int_to_ptr.vmem [resolvable:$true] %s312
      %s314 = sshll.u32 %s7, 4
      %s315 = int_to_ptr.hbm [resolvable:$true] %s314
      %320 = dma.vmem_to_hbm [thread:$0]  %s313, 256, %s315, [#allocation4], 128, 128, 8
    $region49: #{tpu_custom_call.1} parent=1 // pred_fallthru
      _
    // Predicated region
    $region50: #{tpu_custom_call.1} parent=1 // pred_check
      _
    $region51: #{tpu_custom_call.1} parent=1 // pred_check_branch
      %322 = sbr.rel (0) target = $region53
    $region52: #{tpu_custom_call.1} parent=1 // pred_region
      %324 = vsyncadd [#allocation12], 0
      %s325 = sshll.u32 [#allocation11], 4
      %s326 = int_to_ptr.vmem [resolvable:$true] %s325
      %s327 = sshll.u32 %s8, 4
      %s328 = int_to_ptr.hbm [resolvable:$true] %s327
      %333 = dma.vmem_to_hbm [thread:$0]  %s326, 256, %s328, [#allocation12], 128, 128, 8
    $region53: #{tpu_custom_call.1} parent=1 // pred_fallthru
      _
    // Predicated region
    $region54: #{tpu_custom_call.1} parent=1 // pred_check
      _
    $region55: #{tpu_custom_call.1} parent=1 // pred_check_branch
      %335 = sbr.rel (0) target = $region57
    $region56: #{tpu_custom_call.1} parent=1 // pred_region
      %337 = dma.done [#allocation4], 256
    $region57: #{tpu_custom_call.1} parent=1 // pred_fallthru
      _
    // Predicated region
    $region58: #{tpu_custom_call.1} parent=1 // pred_check
      _
    $region59: #{tpu_custom_call.1} parent=1 // pred_check_branch
      %339 = sbr.rel (0) target = $region61
    $region60: #{tpu_custom_call.1} parent=1 // pred_region
      %341 = dma.done [#allocation12], 256
    $region61: #{tpu_custom_call.1} parent=1 // pred_fallthru
      _
    %342 = vsyncpa [#allocation3], 1
    %343 = vsyncpa [#allocation6], 1
    %344 = vsyncpa [#allocation9], 1
    %345 = vsyncpa [#allocation4], 1
    %346 = vsyncpa [#allocation12], 1

</llo_original>
